<compile_context>
chip_gen: v6e
topology: v6e:2x2x1
jax: 0.10.0
libtpu: 0.0.40
codegen_flags: <defaults>
</compile_context>

<pallas_src>
import jax
import jax.numpy as jnp
from jax.experimental import pallas as pl
from jax.experimental.pallas import tpu as pltpu


def _round_up(n, m):
    return (n + m - 1) // m * m


def _vmem_capacity_bytes():
    # Per-TensorCore VMEM: 128 MiB on v5e/v6e, 64 MiB on v7x.  Fall back to
    # the smallest (v7x) figure if the query is unavailable.
    try:
        return int(pltpu.get_tpu_info().vmem_capacity_bytes)
    except Exception:
        return 64 * 1024 * 1024


def cond_jem_kernel(x_ref, w_ref, b_ref, out_ref, acc_ref):
    # x_ref:   (TB, TK) batch x feature tile
    # w_ref:   (1, TK)  class-y weight row slice (VMEM-resident when TK == D)
    # b_ref:   (1, 1)   scalar bias b[y] in SMEM
    # out_ref: (1, TB)  lane-dense energy row (written on the last K step)
    # acc_ref: (1, TB)  f32 accumulator scratch for the D-tiled reduction
    k = pl.program_id(1)

    @pl.when(k == 0)
    def _():
        acc_ref[...] = jnp.zeros_like(acc_ref)

    # logits_row[0, b] += sum_d w[0, d] * x[b, d]   (q @ k^T MXU pattern)
    acc_ref[...] += jax.lax.dot_general(
        w_ref[...],
        x_ref[...],
        dimension_numbers=(((1,), (1,)), ((), ())),
        preferred_element_type=jnp.float32,
    )

    @pl.when(k == pl.num_programs(1) - 1)
    def _():
        out_ref[...] = -(acc_ref[...] + b_ref[0, 0])


def cond_jem_forward(x, w, b, y=0, *, max_tile_b=2048, force_pallas=False):
    """Energy = -classify(x)[:, y], classify(x) = flatten(x) @ W + b.

    y must be a static Python int (as in the PyTorch module's self.y).
    """
    B = x.shape[0]
    x_flat = x.reshape(B, -1)                      # (B, D)
    D = x_flat.shape[1]
    itemsize = jnp.dtype(x_flat.dtype).itemsize

    # Only class y is needed: one weight column -> (1, D) row, one bias scalar.
    w_row = w[:, y].reshape(1, D).astype(x_flat.dtype)   # (1, D)
    b_y = b[y].reshape(1, 1).astype(jnp.float32)         # (1, 1) -> SMEM

    # Tiny batches: launch + pipeline prologue dominates the few KiB of
    # traffic -- let XLA fuse the GEMV into the surrounding graph instead.
    if B < 64 and not force_pallas:
        logits = x_flat.astype(jnp.float32) @ w_row[0].astype(jnp.float32)
        return -(logits + b_y[0, 0])

    # --- tile sizing --------------------------------------------------------
    capacity = _vmem_capacity_bytes()
    # Total budget for the two double-buffered x tiles: ~capacity/4, clamped
    # to [8, 32] MiB  (v5e/v6e -> 32 MiB, v7x 64 MiB/TC -> 16 MiB).
    budget = max(8 << 20, min(32 << 20, capacity // 4))

    # Feature (reduction) tile: full D if a minimal (8, D) double-buffered
    # tile fits, else the largest multiple-of-128 divisor of D that fits
    # (so no ragged reduction tiles are ever read).
    if D <= 128 or 2 * 8 * D * itemsize <= budget:
        tk = D
    else:
        max_tk = max(128, (budget // (2 * 8 * itemsize)) // 128 * 128)
        tk = None
        for cand in range(min(max_tk, D) // 128 * 128, 127, -128):
            if D % cand == 0:
                tk = cand
                break
        if tk is None:
            # TODO(synk): no 128-aligned divisor of D fits the budget; fall
            # back to a single full-D tile and rely on vmem_limit_bytes.
            tk = D

    # Batch tile: multiple of 8 sublanes, sized so both x buffers fit budget.
    tb = (budget // (2 * tk * itemsize)) // 8 * 8
    tb = max(8, min(tb, max_tile_b, _round_up(B, 8)))
    grid_b = pl.cdiv(B, tb)

    # Megacore (v7x): keep the batch-tile count >= 2 and even when B allows,
    # so the "parallel" axis gives both TensorCores balanced work.
    if B >= 16 and grid_b % 2 == 1:
        tb = max(8, _round_up(pl.cdiv(B, grid_b + 1), 8))
        grid_b = pl.cdiv(B, tb)
    grid_k = pl.cdiv(D, tk)        # tk divides D by construction (or tk == D)

    vmem_needed = (2 * tb * tk * itemsize          # double-buffered x tiles
                   + 2 * tk * itemsize             # w row slices
                   + 2 * tb * 4 + tb * 4)          # out blocks + accumulator
    vmem_limit = int(min(capacity, vmem_needed + (8 << 20)))

    out = pl.pallas_call(
        cond_jem_kernel,
        out_shape=jax.ShapeDtypeStruct((grid_b, tb), jnp.float32),
        grid=(grid_b, grid_k),
        in_specs=[
            # x: pipelined (TB, TK) tiles; ragged last batch tile is fine.
            pl.BlockSpec((tb, tk), lambda i, k: (i, k)),
            # W class row slice: resident across the batch axis.
            pl.BlockSpec((1, tk), lambda i, k: (0, k)),
            # b[y]: scalar in SMEM.
            pl.BlockSpec(memory_space=pltpu.MemorySpace.SMEM),
        ],
        # Lane-dense (1, TB) row per batch tile; same block across k.
        out_specs=pl.BlockSpec((1, tb), lambda i, k: (i, 0)),
        scratch_shapes=[pltpu.VMEM((1, tb), jnp.float32)],
        compiler_params=pltpu.CompilerParams(
            dimension_semantics=("parallel", "arbitrary"),
            vmem_limit_bytes=vmem_limit,
        ),
        cost_estimate=pl.CostEstimate(
            flops=2 * B * D,
            transcendentals=0,
            bytes_accessed=B * D * itemsize + D * itemsize + B * 4,
        ),
    )(x_flat, w_row, b_y)

    return out.reshape(grid_b * tb)[:B]            # (B,)


if __name__ == "__main__":
    key = jax.random.PRNGKey(0)
    k_x, k_w, k_b, k_x2 = jax.random.split(key, 4)

    B, C, H, W = 2, 4, 16, 16
    NUM_CLASSES = 10
    D = C * H * W
    y_class = 0                                    # CondJEM default y=0

    x = jax.random.normal(k_x, (B, C, H, W), dtype=jnp.float32)
    w = jax.random.normal(k_w, (D, NUM_CLASSES), dtype=jnp.float32) * 0.02
    b = jax.random.normal(k_b, (NUM_CLASSES,), dtype=jnp.float32) * 0.1

    def ref_energy(xv, yv):
        return -(xv.reshape(xv.shape[0], -1) @ w + b)[:, yv]

    # 1) Module-sized input, forced through the Pallas kernel path.
    energy = cond_jem_forward(x, w, b, y=y_class, force_pallas=True)
    jax.block_until_ready(energy)
    assert energy.shape == (B,)
    assert jnp.allclose(energy, ref_energy(x, y_class), atol=1e-4, rtol=1e-4)

    # 2) Small-batch fast path (plain JAX dispatch, same semantics).
    energy_fast = cond_jem_forward(x, w, b, y=y_class)
    assert jnp.allclose(energy_fast, ref_energy(x, y_class),
                        atol=1e-4, rtol=1e-4)

    # 3) Larger ragged batch: exercises the no-pad cdiv grid and the even
    #    batch-tile split for megacore.
    B2 = 136
    x2 = jax.random.normal(k_x2, (B2, C, H, W), dtype=jnp.float32)
    energy2 = cond_jem_forward(x2, w, b, y=3)
    jax.block_until_ready(energy2)
    assert energy2.shape == (B2,)
    assert jnp.allclose(energy2, ref_energy(x2, 3), atol=1e-4, rtol=1e-4)

    print("KERNEL_OK")
</pallas_src>

<mosaic_0001>
module attributes {stable_mosaic.version = 11 : i64} {
  func.func @cond_jem_kernel(%arg0: i32, %arg1: i32, %arg2: memref<8x1024xf32, #tpu.memory_space<vmem>>, %arg3: memref<1x1024xf32, #tpu.memory_space<vmem>>, %arg4: memref<1x1xf32, #tpu.memory_space<smem>>, %arg5: memref<1x8xf32, #tpu.memory_space<vmem>>, %arg6: memref<1x8xf32, #tpu.memory_space<vmem>>) attributes {dimension_semantics = [#tpu.dimension_semantics<parallel>, #tpu.dimension_semantics<arbitrary>], iteration_bounds = array<i64: 1, 1>, scalar_prefetch = 0 : i64, scratch_operands = 1 : i64, tpu.core_type = #tpu.core_type<tc>, window_params = [{transform_indices = @transform_0, window_bounds = array<i64: 8, 1024>}, {transform_indices = @transform_1, window_bounds = array<i64: 1, 1024>}, {transform_indices = @transform_2, window_bounds = array<i64: 1, 1>}, {transform_indices = @transform_3, window_bounds = array<i64: 1, 8>}]} {
    %c0_i32 = arith.constant 0 : i32
    %0 = arith.cmpi eq, %arg1, %c0_i32 : i32
    %1 = arith.extui %0 : i1 to i32
    %c0_i32_0 = arith.constant 0 : i32
    %2 = arith.cmpi ne, %1, %c0_i32_0 : i32
    scf.if %2 {
      %cst_10 = arith.constant 0.000000e+00 : f32
      %12 = vector.broadcast %cst_10 : f32 to vector<1x8xf32>
      %c0_11 = arith.constant 0 : index
      %c0_12 = arith.constant 0 : index
      %13 = vector.load %arg6[%c0_11, %c0_12] : memref<1x8xf32, #tpu.memory_space<vmem>>, vector<1x8xf32>
      tpu.vector_store %arg6[%c0_11, %c0_12], %12 {strides = array<i32>} : memref<1x8xf32, #tpu.memory_space<vmem>>, vector<1x8xf32>,
    } else {
    }
    %c0 = arith.constant 0 : index
    %c0_1 = arith.constant 0 : index
    %3 = vector.load %arg6[%c0, %c0_1] : memref<1x8xf32, #tpu.memory_space<vmem>>, vector<1x8xf32>
    %c0_2 = arith.constant 0 : index
    %c0_3 = arith.constant 0 : index
    %4 = vector.load %arg3[%c0_2, %c0_3] : memref<1x1024xf32, #tpu.memory_space<vmem>>, vector<1x1024xf32>
    %c0_4 = arith.constant 0 : index
    %c0_5 = arith.constant 0 : index
    %5 = vector.load %arg2[%c0_4, %c0_5] : memref<8x1024xf32, #tpu.memory_space<vmem>>, vector<8x1024xf32>
    %cst = arith.constant dense<0.000000e+00> : vector<1x8xf32>
    %6 = tpu.matmul %4, %5, %cst {dimension_numbers = #tpu.dot_dimension_numbers<[1], [1], [0], [0], [0, 0, 1, 0], [], []>} : vector<1x1024xf32>, vector<8x1024xf32>, vector<1x8xf32> -> vector<1x8xf32>
    %7 = arith.addf %3, %6 : vector<1x8xf32>
    %c0_6 = arith.constant 0 : index
    %c0_7 = arith.constant 0 : index
    %8 = vector.load %arg6[%c0_6, %c0_7] : memref<1x8xf32, #tpu.memory_space<vmem>>, vector<1x8xf32>
    tpu.vector_store %arg6[%c0_6, %c0_7], %7 {strides = array<i32>} : memref<1x8xf32, #tpu.memory_space<vmem>>, vector<1x8xf32>,
    %c0_i32_8 = arith.constant 0 : i32
    %9 = arith.cmpi eq, %arg1, %c0_i32_8 : i32
    %10 = arith.extui %9 : i1 to i32
    %c0_i32_9 = arith.constant 0 : i32
    %11 = arith.cmpi ne, %10, %c0_i32_9 : i32
    scf.if %11 {
      %c0_10 = arith.constant 0 : index
      %c0_11 = arith.constant 0 : index
      %12 = vector.load %arg6[%c0_10, %c0_11] : memref<1x8xf32, #tpu.memory_space<vmem>>, vector<1x8xf32>
      %c0_12 = arith.constant 0 : index
      %c0_13 = arith.constant 0 : index
      %13 = memref.load %arg4[%c0_12, %c0_13] : memref<1x1xf32, #tpu.memory_space<smem>>
      %14 = vector.broadcast %13 : f32 to vector<1x8xf32>
      %15 = arith.addf %12, %14 : vector<1x8xf32>
      %cst_14 = arith.constant 0.000000e+00 : f32
      %16 = vector.broadcast %cst_14 : f32 to vector<1x8xf32>
      %17 = arith.subf %16, %15 : vector<1x8xf32>
      %c0_15 = arith.constant 0 : index
      %c0_16 = arith.constant 0 : index
      %18 = vector.load %arg5[%c0_15, %c0_16] : memref<1x8xf32, #tpu.memory_space<vmem>>, vector<1x8xf32>
      tpu.vector_store %arg5[%c0_15, %c0_16], %17 {strides = array<i32>} : memref<1x8xf32, #tpu.memory_space<vmem>>, vector<1x8xf32>,
    } else {
    }
    return
  }
  func.func @transform_0(%arg0: i32, %arg1: i32) -> (i32, i32) {
    %c0_i32 = arith.constant 0 : i32
    return %arg0, %arg1 : i32, i32
  }
  func.func @transform_1(%arg0: i32, %arg1: i32) -> (i32, i32) {
    %c0_i32 = arith.constant 0 : i32
    %c0_i32_0 = arith.constant 0 : i32
    return %c0_i32, %arg1 : i32, i32
  }
  func.func @transform_2(%arg0: i32, %arg1: i32) -> (i32, i32) {
    %c0_i32 = arith.constant 0 : i32
    %c0_i32_0 = arith.constant 0 : i32
    %c0_i32_1 = arith.constant 0 : i32
    return %c0_i32, %c0_i32_0 : i32, i32
  }
  func.func @transform_3(%arg0: i32, %arg1: i32) -> (i32, i32) {
    %c0_i32 = arith.constant 0 : i32
    %c0_i32_0 = arith.constant 0 : i32
    return %arg0, %c0_i32 : i32, i32
  }
}

</mosaic_0001>

<llo_original>
// kernel: tpu_custom_call.1
$region0: #{tpu_custom_call.1}
  #allocation0 [shape = 'u32[]', space=smem, size = 0x4, offset = 0x4, fixed_abs, tag = 'smem constant byte address 0x4 - core index']
  #allocation1 [shape = 'u32[144,128]{1,0:T(1,128)}', space=vmem, size = 0x12000, scoped, tag = 'internal scratch']
  #allocation2 [shape = 'f32[1,8]{1,0:T(1,128)}', space=vmem, size = 0x200, scoped, tag = 'scratch operand']
  #allocation3 [shape = 'f32[1,1]{1,0:T(1,128)S(6)}', space=smem, size = 0x200, scoped, tag = 'scoped memory for tpu_custom_call.1']
  %s0 = inlined_call_operand.hbm [shape: f32[2,1024], index: 0, kind: input, shape index: {}]
  %s1 = inlined_call_operand.hbm [shape: f32[1,1024], index: 1, kind: input, shape index: {}]
  %s2 = inlined_call_operand.<no memory space> [shape: f32[1,1], index: 2, kind: input, shape index: {}]
  %s3 = inlined_call_operand.hbm [shape: f32[1,8], index: 3, kind: output, shape index: {}]
  %s4 = sld [smem:[#allocation0]]
  $region38: #{tpu_custom_call.1} parent=0
    _
  %s6 = ssub.s32 1, %s4
  %s7 = scalar_select 0, %s6, %s4
  %8 = sst [smem:[#allocation3]] %s2
  $region1: #{tpu_custom_call.1} parent=0
    #allocation4 [shape = 'u8[32768]{0}', space=vmem, size = 0x8000, scoped, tag = 'input window, operand 0, single buffered']
    #allocation5 [shape = 's32[1]{0}', space=sflag, size = 0x4, scoped, tag = 'scoped memory for tpu_custom_call.1']
    #allocation6 [shape = 's32[1]{0}', space=sflag, size = 0x4, scoped, tag = 'scoped memory for tpu_custom_call.1']
    #allocation7 [shape = 'u8[4096]{0}', space=vmem, size = 0x1000, scoped, tag = 'input window, operand 1, single buffered']
    #allocation8 [shape = 's32[1]{0}', space=sflag, size = 0x4, scoped, tag = 'scoped memory for tpu_custom_call.1']
    #allocation9 [shape = 'u8[512]{0}', space=vmem, size = 0x400, scoped, tag = 'output window, operand 0, single buffered']
    %9 = vsyncpa [#allocation5], 0
    %10 = vsyncpa [#allocation8], 0
    %11 = vsyncpa [#allocation6], 0
    // Predicated region
    $region2: #{tpu_custom_call.1} parent=1 // pred_check
      _
    $region3: #{tpu_custom_call.1} parent=1 // pred_check_branch
      %13 = sbr.rel (0) target = $region5
    $region4: #{tpu_custom_call.1} parent=1 // pred_region
      %s15 = ssub.s32 1024, 256
      %16 = vsyncadd [#allocation5], %s15
      %s17 = sshll.u32 [#allocation4], 4
      %s18 = int_to_ptr.vmem [resolvable:$true] %s17
      %23 = dma.hbm_to_vmem [thread:$0]  %s0, 256, %s18, [#allocation5], 256, 256, 16
    $region5: #{tpu_custom_call.1} parent=1 // pred_fallthru
      _
    // Predicated region
    $region6: #{tpu_custom_call.1} parent=1 // pred_check
      _
    $region7: #{tpu_custom_call.1} parent=1 // pred_check_branch
      %25 = sbr.rel (0) target = $region9
    $region8: #{tpu_custom_call.1} parent=1 // pred_region
      %s27 = ssub.s32 128, 128
      %28 = vsyncadd [#allocation8], %s27
      %s30 = sshll.u32 [#allocation7], 4
      %s31 = int_to_ptr.vmem [resolvable:$true] %s30
      %33 = dma.hbm_to_vmem [thread:$0]  %s1, 128, %s31, [#allocation8]
    $region9: #{tpu_custom_call.1} parent=1 // pred_fallthru
      _
    // Predicated region
    $region10: #{tpu_custom_call.1} parent=1 // pred_check
      _
    $region11: #{tpu_custom_call.1} parent=1 // pred_check_branch
      %35 = sbr.rel (0) target = $region13
    $region12: #{tpu_custom_call.1} parent=1 // pred_region
      _
    $region13: #{tpu_custom_call.1} parent=1 // pred_fallthru
      _
    // Predicated region
    $region14: #{tpu_custom_call.1} parent=1 // pred_check
      _
    $region15: #{tpu_custom_call.1} parent=1 // pred_check_branch
      %37 = sbr.rel (0) target = $region17
    $region16: #{tpu_custom_call.1} parent=1 // pred_region
      %38 = dma.done [#allocation5], 1024
    $region17: #{tpu_custom_call.1} parent=1 // pred_fallthru
      _
    // Predicated region
    $region18: #{tpu_custom_call.1} parent=1 // pred_check
      _
    $region19: #{tpu_custom_call.1} parent=1 // pred_check_branch
      %40 = sbr.rel (0) target = $region21
    $region20: #{tpu_custom_call.1} parent=1 // pred_region
      %41 = dma.done [#allocation8], 128
    $region21: #{tpu_custom_call.1} parent=1 // pred_fallthru
      _
    %p42 = scmp.eq.s32.totalorder 0, 0
    // Predicated region
    $region22: #{tpu_custom_call.1} parent=1 // pred_check
      %p43 = pneg %p42
    $region23: #{tpu_custom_call.1} parent=1 // pred_check_branch
      %45 = sbr.rel (%p43) target = $region25
    $region24: #{tpu_custom_call.1} parent=1 // pred_region
      %vm46 = vcmask 57344
      %47 = vst.msk [vmem:[#allocation2] sm:$0x1] %vm46, 0.0
    $region25: #{tpu_custom_call.1} parent=1 // pred_fallthru
      _
    %v48 = vld [vmem:[#allocation2] sm:$0x1]
    %v49 = vld [vmem:[#allocation7] sm:$0xff]
    %v50 = vld [vmem:[#allocation4] sm:$0xff]
    %v51 = vld [vmem:[#allocation4 + $0x8] sm:$0xff]
    %v52 = vld [vmem:[#allocation4 + $0x10] sm:$0xff]
    %v53 = vld [vmem:[#allocation4 + $0x18] sm:$0xff]
    %v54 = vld [vmem:[#allocation4 + $0x20] sm:$0xff]
    %v55 = vld [vmem:[#allocation4 + $0x28] sm:$0xff]
    %v56 = vld [vmem:[#allocation4 + $0x30] sm:$0xff]
    %v57 = vld [vmem:[#allocation4 + $0x38] sm:$0xff]
    %v59 = vlaneseq
    %v60 = vshrl.u32 %v59, 7
    %v61 = vsub.s32 0, %v60
    %v62 = vrot.slane %v49, %v61
    %v63 = vlaneseq
    %v64 = vshrl.u32 %v63, 7
    %v65 = vsub.s32 1, %v64
    %v66 = vrot.slane %v49, %v65
    %v67 = vlaneseq
    %v68 = vshrl.u32 %v67, 7
    %v69 = vsub.s32 2, %v68
    %v70 = vrot.slane %v49, %v69
    %v71 = vlaneseq
    %v72 = vshrl.u32 %v71, 7
    %v73 = vsub.s32 3, %v72
    %v74 = vrot.slane %v49, %v73
    %v75 = vlaneseq
    %v76 = vshrl.u32 %v75, 7
    %v77 = vsub.s32 4, %v76
    %v78 = vrot.slane %v49, %v77
    %v79 = vlaneseq
    %v80 = vshrl.u32 %v79, 7
    %v81 = vsub.s32 5, %v80
    %v82 = vrot.slane %v49, %v81
    %v83 = vlaneseq
    %v84 = vshrl.u32 %v83, 7
    %v85 = vsub.s32 6, %v84
    %v86 = vrot.slane %v49, %v85
    %v87 = vlaneseq
    %v88 = vshrl.u32 %v87, 7
    %v89 = vsub.s32 7, %v88
    %v90 = vrot.slane %v49, %v89
    %v107 = vcombine.low %v50, %v52
    %v108 = vcombine.high %v50, %v52
    %v109 = vcombine.low %v54, %v56
    %v110 = vcombine.high %v54, %v56
    %v112 = vunpack.c.l.s4 1983009808
    %v113 = vunpack.c.0.s8 %v112
    %v114 = vlaneseq
    %v115 = vshrl.u32 %v114, 7
    %v116 = vsub.s32 %v113, %v115
    %v117 = vrot.slane %v107, %v116
    %v119 = vunpack.c.l.s4 1983009808
    %v120 = vunpack.c.0.s8 %v119
    %v121 = vlaneseq
    %v122 = vshrl.u32 %v121, 7
    %v123 = vsub.s32 %v120, %v122
    %v124 = vrot.slane %v108, %v123
    %v126 = vunpack.c.l.s4 1983009808
    %v127 = vunpack.c.0.s8 %v126
    %v128 = vlaneseq
    %v129 = vshrl.u32 %v128, 7
    %v130 = vsub.s32 %v127, %v129
    %v131 = vrot.slane %v109, %v130
    %v133 = vunpack.c.l.s4 1983009808
    %v134 = vunpack.c.0.s8 %v133
    %v135 = vlaneseq
    %v136 = vshrl.u32 %v135, 7
    %v137 = vsub.s32 %v134, %v136
    %v138 = vrot.slane %v110, %v137
    %v139 = vcombine.low %v117, %v131
    %v140 = vcombine.high %v117, %v131
    %v141 = vcombine.low %v124, %v138
    %v142 = vcombine.high %v124, %v138
    %v143 = vcombine.low %v51, %v53
    %v144 = vcombine.high %v51, %v53
    %v145 = vcombine.low %v55, %v57
    %v146 = vcombine.high %v55, %v57
    %v148 = vunpack.c.l.s4 1983009808
    %v149 = vunpack.c.0.s8 %v148
    %v150 = vlaneseq
    %v151 = vshrl.u32 %v150, 7
    %v152 = vsub.s32 %v149, %v151
    %v153 = vrot.slane %v143, %v152
    %v155 = vunpack.c.l.s4 1983009808
    %v156 = vunpack.c.0.s8 %v155
    %v157 = vlaneseq
    %v158 = vshrl.u32 %v157, 7
    %v159 = vsub.s32 %v156, %v158
    %v160 = vrot.slane %v144, %v159
    %v162 = vunpack.c.l.s4 1983009808
    %v163 = vunpack.c.0.s8 %v162
    %v164 = vlaneseq
    %v165 = vshrl.u32 %v164, 7
    %v166 = vsub.s32 %v163, %v165
    %v167 = vrot.slane %v145, %v166
    %v169 = vunpack.c.l.s4 1983009808
    %v170 = vunpack.c.0.s8 %v169
    %v171 = vlaneseq
    %v172 = vshrl.u32 %v171, 7
    %v173 = vsub.s32 %v170, %v172
    %v174 = vrot.slane %v146, %v173
    %v175 = vcombine.low %v153, %v167
    %v176 = vcombine.high %v153, %v167
    %v177 = vcombine.low %v160, %v174
    %v178 = vcombine.high %v160, %v174
    %187 = vmatprep.subr.mxu0 0.0
    %188 = vmatpush1.xpose.msra.mxu0 0.0
    %189 = vmatprep.subr.mxu0 0.0
    %190 = vmatpush1.xpose.msra.mxu0 0.0
    %191 = vmatprep.subr.mxu0 0.0
    %192 = vmatpush1.xpose.msra.mxu0 0.0
    %193 = vmatprep.subr.mxu0 0.0
    %194 = vmatpush1.xpose.msra.mxu0 0.0
    %195 = vmatprep.subr.mxu0 0.0
    %196 = vmatpush1.xpose.msra.mxu0 0.0
    %197 = vmatprep.subr.mxu0 0.0
    %198 = vmatpush1.xpose.msra.mxu0 0.0
    %199 = vmatprep.subr.mxu0 0.0
    %200 = vmatpush1.xpose.msra.mxu0 0.0
    %201 = vmatprep.subr.mxu0 0.0
    %202 = vmatpush1.xpose.msra.mxu0 0.0
    %203 = vmatprep.subr.mxu0 0.0
    %204 = vmatpush1.xpose.msra.mxu0 0.0
    %205 = vmatprep.subr.mxu0 0.0
    %206 = vmatpush1.xpose.msra.mxu0 0.0
    %207 = vmatprep.subr.mxu0 0.0
    %208 = vmatpush1.xpose.msra.mxu0 0.0
    %209 = vmatprep.subr.mxu0 0.0
    %210 = vmatpush1.xpose.msra.mxu0 0.0
    %211 = vmatprep.subr.mxu0 0.0
    %212 = vmatpush1.xpose.msra.mxu0 0.0
    %213 = vmatprep.subr.mxu0 0.0
    %214 = vmatpush1.xpose.msra.mxu0 0.0
    %215 = vmatprep.subr.mxu0 0.0
    %216 = vmatpush1.xpose.msra.mxu0 0.0
    %217 = vmatprep.subr.mxu0 %v140
    %218 = vmatpush1.xpose.msra.mxu0 %v139
    %219 = vmatprep.subr.mxu0 0.0
    %220 = vmatpush2.xpose.msra.mxu0 0.0
    %221 = vmatprep.subr.mxu0 0.0
    %222 = vmatpush2.xpose.msra.mxu0 0.0
    %223 = vmatprep.subr.mxu0 0.0
    %224 = vmatpush2.xpose.msra.mxu0 0.0
    %225 = vmatprep.subr.mxu0 0.0
    %226 = vmatpush2.xpose.msra.mxu0 0.0
    %227 = vmatprep.subr.mxu0 0.0
    %228 = vmatpush2.xpose.msra.mxu0 0.0
    %229 = vmatprep.subr.mxu0 0.0
    %230 = vmatpush2.xpose.msra.mxu0 0.0
    %231 = vmatprep.subr.mxu0 0.0
    %232 = vmatpush2.xpose.msra.mxu0 0.0
    %233 = vmatprep.subr.mxu0 0.0
    %234 = vmatpush2.xpose.msra.mxu0 0.0
    %235 = vmatprep.subr.mxu0 0.0
    %236 = vmatpush2.xpose.msra.mxu0 0.0
    %237 = vmatprep.subr.mxu0 0.0
    %238 = vmatpush2.xpose.msra.mxu0 0.0
    %239 = vmatprep.subr.mxu0 0.0
    %240 = vmatpush2.xpose.msra.mxu0 0.0
    %241 = vmatprep.subr.mxu0 0.0
    %242 = vmatpush2.xpose.msra.mxu0 0.0
    %243 = vmatprep.subr.mxu0 0.0
    %244 = vmatpush2.xpose.msra.mxu0 0.0
    %245 = vmatprep.subr.mxu0 0.0
    %246 = vmatpush2.xpose.msra.mxu0 0.0
    %247 = vmatprep.subr.mxu0 0.0
    %248 = vmatpush2.xpose.msra.mxu0 0.0
    %249 = vmatprep.subr.mxu0 0.0
    %250 = vmatpush2.xpose.msra.mxu0 0.0
    %251 = vmatprep.mubr.f32.mxu0 %v66
    %252 = vmatmul.mubr.f32.gmra.mxu0 %v62
    %v253 = vpop.f32.mrf.mxu0
    %v254 = vadd.f32 0.0, %v253
    %v255 = vpop.f32.mrf.mxu0
    %256 = vdwg.mxu0
    %257 = vmatprep.subr.mxu0 0.0
    %258 = vmatpush1.xpose.msra.mxu0 0.0
    %259 = vmatprep.subr.mxu0 0.0
    %260 = vmatpush1.xpose.msra.mxu0 0.0
    %261 = vmatprep.subr.mxu0 0.0
    %262 = vmatpush1.xpose.msra.mxu0 0.0
    %263 = vmatprep.subr.mxu0 0.0
    %264 = vmatpush1.xpose.msra.mxu0 0.0
    %265 = vmatprep.subr.mxu0 0.0
    %266 = vmatpush1.xpose.msra.mxu0 0.0
    %267 = vmatprep.subr.mxu0 0.0
    %268 = vmatpush1.xpose.msra.mxu0 0.0
    %269 = vmatprep.subr.mxu0 0.0
    %270 = vmatpush1.xpose.msra.mxu0 0.0
    %271 = vmatprep.subr.mxu0 0.0
    %272 = vmatpush1.xpose.msra.mxu0 0.0
    %273 = vmatprep.subr.mxu0 0.0
    %274 = vmatpush1.xpose.msra.mxu0 0.0
    %275 = vmatprep.subr.mxu0 0.0
    %276 = vmatpush1.xpose.msra.mxu0 0.0
    %277 = vmatprep.subr.mxu0 0.0
    %278 = vmatpush1.xpose.msra.mxu0 0.0
    %279 = vmatprep.subr.mxu0 0.0
    %280 = vmatpush1.xpose.msra.mxu0 0.0
    %281 = vmatprep.subr.mxu0 0.0
    %282 = vmatpush1.xpose.msra.mxu0 0.0
    %283 = vmatprep.subr.mxu0 0.0
    %284 = vmatpush1.xpose.msra.mxu0 0.0
    %285 = vmatprep.subr.mxu0 0.0
    %286 = vmatpush1.xpose.msra.mxu0 0.0
    %287 = vmatprep.subr.mxu0 %v142
    %288 = vmatpush1.xpose.msra.mxu0 %v141
    %289 = vmatprep.subr.mxu0 0.0
    %290 = vmatpush2.xpose.msra.mxu0 0.0
    %291 = vmatprep.subr.mxu0 0.0
    %292 = vmatpush2.xpose.msra.mxu0 0.0
    %293 = vmatprep.subr.mxu0 0.0
    %294 = vmatpush2.xpose.msra.mxu0 0.0
    %295 = vmatprep.subr.mxu0 0.0
    %296 = vmatpush2.xpose.msra.mxu0 0.0
    %297 = vmatprep.subr.mxu0 0.0
    %298 = vmatpush2.xpose.msra.mxu0 0.0
    %299 = vmatprep.subr.mxu0 0.0
    %300 = vmatpush2.xpose.msra.mxu0 0.0
    %301 = vmatprep.subr.mxu0 0.0
    %302 = vmatpush2.xpose.msra.mxu0 0.0
    %303 = vmatprep.subr.mxu0 0.0
    %304 = vmatpush2.xpose.msra.mxu0 0.0
    %305 = vmatprep.subr.mxu0 0.0
    %306 = vmatpush2.xpose.msra.mxu0 0.0
    %307 = vmatprep.subr.mxu0 0.0
    %308 = vmatpush2.xpose.msra.mxu0 0.0
    %309 = vmatprep.subr.mxu0 0.0
    %310 = vmatpush2.xpose.msra.mxu0 0.0
    %311 = vmatprep.subr.mxu0 0.0
    %312 = vmatpush2.xpose.msra.mxu0 0.0
    %313 = vmatprep.subr.mxu0 0.0
    %314 = vmatpush2.xpose.msra.mxu0 0.0
    %315 = vmatprep.subr.mxu0 0.0
    %316 = vmatpush2.xpose.msra.mxu0 0.0
    %317 = vmatprep.subr.mxu0 0.0
    %318 = vmatpush2.xpose.msra.mxu0 0.0
    %319 = vmatprep.subr.mxu0 0.0
    %320 = vmatpush2.xpose.msra.mxu0 0.0
    %321 = vmatprep.mubr.f32.mxu0 %v74
    %322 = vmatmul.mubr.f32.gmra.mxu0 %v70
    %v323 = vpop.f32.mrf.mxu0
    %v324 = vadd.f32 %v254, %v323
    %v325 = vpop.f32.mrf.mxu0
    %326 = vdwg.mxu0
    %327 = vmatprep.subr.mxu0 0.0
    %328 = vmatpush1.xpose.msra.mxu0 0.0
    %329 = vmatprep.subr.mxu0 0.0
    %330 = vmatpush1.xpose.msra.mxu0 0.0
    %331 = vmatprep.subr.mxu0 0.0
    %332 = vmatpush1.xpose.msra.mxu0 0.0
    %333 = vmatprep.subr.mxu0 0.0
    %334 = vmatpush1.xpose.msra.mxu0 0.0
    %335 = vmatprep.subr.mxu0 0.0
    %336 = vmatpush1.xpose.msra.mxu0 0.0
    %337 = vmatprep.subr.mxu0 0.0
    %338 = vmatpush1.xpose.msra.mxu0 0.0
    %339 = vmatprep.subr.mxu0 0.0
    %340 = vmatpush1.xpose.msra.mxu0 0.0
    %341 = vmatprep.subr.mxu0 0.0
    %342 = vmatpush1.xpose.msra.mxu0 0.0
    %343 = vmatprep.subr.mxu0 0.0
    %344 = vmatpush1.xpose.msra.mxu0 0.0
    %345 = vmatprep.subr.mxu0 0.0
    %346 = vmatpush1.xpose.msra.mxu0 0.0
    %347 = vmatprep.subr.mxu0 0.0
    %348 = vmatpush1.xpose.msra.mxu0 0.0
    %349 = vmatprep.subr.mxu0 0.0
    %350 = vmatpush1.xpose.msra.mxu0 0.0
    %351 = vmatprep.subr.mxu0 0.0
    %352 = vmatpush1.xpose.msra.mxu0 0.0
    %353 = vmatprep.subr.mxu0 0.0
    %354 = vmatpush1.xpose.msra.mxu0 0.0
    %355 = vmatprep.subr.mxu0 0.0
    %356 = vmatpush1.xpose.msra.mxu0 0.0
    %357 = vmatprep.subr.mxu0 %v176
    %358 = vmatpush1.xpose.msra.mxu0 %v175
    %359 = vmatprep.subr.mxu0 0.0
    %360 = vmatpush2.xpose.msra.mxu0 0.0
    %361 = vmatprep.subr.mxu0 0.0
    %362 = vmatpush2.xpose.msra.mxu0 0.0
    %363 = vmatprep.subr.mxu0 0.0
    %364 = vmatpush2.xpose.msra.mxu0 0.0
    %365 = vmatprep.subr.mxu0 0.0
    %366 = vmatpush2.xpose.msra.mxu0 0.0
    %367 = vmatprep.subr.mxu0 0.0
    %368 = vmatpush2.xpose.msra.mxu0 0.0
    %369 = vmatprep.subr.mxu0 0.0
    %370 = vmatpush2.xpose.msra.mxu0 0.0
    %371 = vmatprep.subr.mxu0 0.0
    %372 = vmatpush2.xpose.msra.mxu0 0.0
    %373 = vmatprep.subr.mxu0 0.0
    %374 = vmatpush2.xpose.msra.mxu0 0.0
    %375 = vmatprep.subr.mxu0 0.0
    %376 = vmatpush2.xpose.msra.mxu0 0.0
    %377 = vmatprep.subr.mxu0 0.0
    %378 = vmatpush2.xpose.msra.mxu0 0.0
    %379 = vmatprep.subr.mxu0 0.0
    %380 = vmatpush2.xpose.msra.mxu0 0.0
    %381 = vmatprep.subr.mxu0 0.0
    %382 = vmatpush2.xpose.msra.mxu0 0.0
    %383 = vmatprep.subr.mxu0 0.0
    %384 = vmatpush2.xpose.msra.mxu0 0.0
    %385 = vmatprep.subr.mxu0 0.0
    %386 = vmatpush2.xpose.msra.mxu0 0.0
    %387 = vmatprep.subr.mxu0 0.0
    %388 = vmatpush2.xpose.msra.mxu0 0.0
    %389 = vmatprep.subr.mxu0 0.0
    %390 = vmatpush2.xpose.msra.mxu0 0.0
    %391 = vmatprep.mubr.f32.mxu0 %v82
    %392 = vmatmul.mubr.f32.gmra.mxu0 %v78
    %v393 = vpop.f32.mrf.mxu0
    %v394 = vadd.f32 %v324, %v393
    %v395 = vpop.f32.mrf.mxu0
    %396 = vdwg.mxu0
    %397 = vmatprep.subr.mxu0 0.0
    %398 = vmatpush1.xpose.msra.mxu0 0.0
    %399 = vmatprep.subr.mxu0 0.0
    %400 = vmatpush1.xpose.msra.mxu0 0.0
    %401 = vmatprep.subr.mxu0 0.0
    %402 = vmatpush1.xpose.msra.mxu0 0.0
    %403 = vmatprep.subr.mxu0 0.0
    %404 = vmatpush1.xpose.msra.mxu0 0.0
    %405 = vmatprep.subr.mxu0 0.0
    %406 = vmatpush1.xpose.msra.mxu0 0.0
    %407 = vmatprep.subr.mxu0 0.0
    %408 = vmatpush1.xpose.msra.mxu0 0.0
    %409 = vmatprep.subr.mxu0 0.0
    %410 = vmatpush1.xpose.msra.mxu0 0.0
    %411 = vmatprep.subr.mxu0 0.0
    %412 = vmatpush1.xpose.msra.mxu0 0.0
    %413 = vmatprep.subr.mxu0 0.0
    %414 = vmatpush1.xpose.msra.mxu0 0.0
    %415 = vmatprep.subr.mxu0 0.0
    %416 = vmatpush1.xpose.msra.mxu0 0.0
    %417 = vmatprep.subr.mxu0 0.0
    %418 = vmatpush1.xpose.msra.mxu0 0.0
    %419 = vmatprep.subr.mxu0 0.0
    %420 = vmatpush1.xpose.msra.mxu0 0.0
    %421 = vmatprep.subr.mxu0 0.0
    %422 = vmatpush1.xpose.msra.mxu0 0.0
    %423 = vmatprep.subr.mxu0 0.0
    %424 = vmatpush1.xpose.msra.mxu0 0.0
    %425 = vmatprep.subr.mxu0 0.0
    %426 = vmatpush1.xpose.msra.mxu0 0.0
    %427 = vmatprep.subr.mxu0 %v178
    %428 = vmatpush1.xpose.msra.mxu0 %v177
    %429 = vmatprep.subr.mxu0 0.0
    %430 = vmatpush2.xpose.msra.mxu0 0.0
    %431 = vmatprep.subr.mxu0 0.0
    %432 = vmatpush2.xpose.msra.mxu0 0.0
    %433 = vmatprep.subr.mxu0 0.0
    %434 = vmatpush2.xpose.msra.mxu0 0.0
    %435 = vmatprep.subr.mxu0 0.0
    %436 = vmatpush2.xpose.msra.mxu0 0.0
    %437 = vmatprep.subr.mxu0 0.0
    %438 = vmatpush2.xpose.msra.mxu0 0.0
    %439 = vmatprep.subr.mxu0 0.0
    %440 = vmatpush2.xpose.msra.mxu0 0.0
    %441 = vmatprep.subr.mxu0 0.0
    %442 = vmatpush2.xpose.msra.mxu0 0.0
    %443 = vmatprep.subr.mxu0 0.0
    %444 = vmatpush2.xpose.msra.mxu0 0.0
    %445 = vmatprep.subr.mxu0 0.0
    %446 = vmatpush2.xpose.msra.mxu0 0.0
    %447 = vmatprep.subr.mxu0 0.0
    %448 = vmatpush2.xpose.msra.mxu0 0.0
    %449 = vmatprep.subr.mxu0 0.0
    %450 = vmatpush2.xpose.msra.mxu0 0.0
    %451 = vmatprep.subr.mxu0 0.0
    %452 = vmatpush2.xpose.msra.mxu0 0.0
    %453 = vmatprep.subr.mxu0 0.0
    %454 = vmatpush2.xpose.msra.mxu0 0.0
    %455 = vmatprep.subr.mxu0 0.0
    %456 = vmatpush2.xpose.msra.mxu0 0.0
    %457 = vmatprep.subr.mxu0 0.0
    %458 = vmatpush2.xpose.msra.mxu0 0.0
    %459 = vmatprep.subr.mxu0 0.0
    %460 = vmatpush2.xpose.msra.mxu0 0.0
    %461 = vmatprep.mubr.f32.mxu0 %v90
    %462 = vmatmul.mubr.f32.gmra.mxu0 %v86
    %v463 = vpop.f32.mrf.mxu0
    %v464 = vadd.f32 %v394, %v463
    %v465 = vpop.f32.mrf.mxu0
    %466 = vdwg.mxu0
    %v467 = vadd.f32 %v48, %v464
    %vm468 = vcmask 57344
    %469 = vst.msk [vmem:[#allocation2] sm:$0x1] %vm468, %v467
    // Predicated region
    $region26: #{tpu_custom_call.1} parent=1 // pred_check
      %p470 = pneg %p42
    $region27: #{tpu_custom_call.1} parent=1 // pred_check_branch
      %472 = sbr.rel (%p470) target = $region29
    $region28: #{tpu_custom_call.1} parent=1 // pred_region
      %v473 = vld [vmem:[#allocation2] sm:$0x1]
      %s474 = sld [smem:[#allocation3]]
      %v475 = vstv %s474
      %v476 = vadd.f32 %v473, %v475
      %v477 = vsub.f32 0.0, %v476
      %478 = vst.msk [vmem:[#allocation9] sm:$0x1] %vm468, %v477
    $region29: #{tpu_custom_call.1} parent=1 // pred_fallthru
      _
    // Predicated region
    $region30: #{tpu_custom_call.1} parent=1 // pred_check
      _
    $region31: #{tpu_custom_call.1} parent=1 // pred_check_branch
      %480 = sbr.rel (0) target = $region33
    $region32: #{tpu_custom_call.1} parent=1 // pred_region
      %s482 = ssub.s32 16, 16
      %483 = vsyncadd [#allocation6], %s482
      %s485 = sshll.u32 [#allocation9], 4
      %s486 = int_to_ptr.vmem [resolvable:$true] %s485
      %488 = dma.vmem_to_hbm [thread:$0]  %s486, 16, %s3, [#allocation6]
    $region33: #{tpu_custom_call.1} parent=1 // pred_fallthru
      _
    // Predicated region
    $region34: #{tpu_custom_call.1} parent=1 // pred_check
      _
    $region35: #{tpu_custom_call.1} parent=1 // pred_check_branch
      %490 = sbr.rel (0) target = $region37
    $region36: #{tpu_custom_call.1} parent=1 // pred_region
      %491 = dma.done [#allocation6], 16
    $region37: #{tpu_custom_call.1} parent=1 // pred_fallthru
      _
    %492 = vsyncpa [#allocation5], 1
    %493 = vsyncpa [#allocation8], 1
    %494 = vsyncpa [#allocation6], 1

</llo_original>
